<compile_context>
chip_gen: v7x
topology: tpu7x:2x2x1
jax: 0.10.0
libtpu: 0.0.40
codegen_flags: <defaults>
</compile_context>

<pallas_src>
import jax
import jax.numpy as jnp
from jax.experimental import pallas as pl
from jax.experimental.pallas import tpu as pltpu

VMEM_SPEC = pl.BlockSpec(memory_space=pltpu.MemorySpace.VMEM)
SMEM_SPEC = pl.BlockSpec(memory_space=pltpu.MemorySpace.SMEM)


# ---------------------------------------------------------------------------
# Single fused kernel: backbone (both views) + view-stacked projector
# (Linear -> BN(per-view) -> ReLU -> Linear) + normalized cosine loss.
#   x1, x2 : [B, C, P]   (P = H*W, NCHW spatially flattened -- no transpose)
#   wbb    : [C, E, 1]   backbone 1x1-conv weight, pre-shaped in the wrapper
#   bbb    : [1, E, 1]   backbone bias, pre-shaped in the wrapper
#   w1     : [E, H], b1/gamma/beta: [1, H], w2: [H, M]   (projector; M == E)
#   loss   : [1, 1]      scalar in SMEM
# ---------------------------------------------------------------------------
def byol_fused_kernel(x1_ref, x2_ref, wbb_ref, bbb_ref, w1_ref, b1_ref,
                      gamma_ref, beta_ref, w2_ref, loss_ref):
    B, C, P = x1_ref.shape

    wbb = wbb_ref[...]       # [C, E, 1]
    bbb = bbb_ref[...]       # [1, E, 1]
    w1 = w1_ref[...]         # [E, H]
    b1 = b1_ref[...]         # [1, H]
    gamma = gamma_ref[...]   # [1, H]
    beta = beta_ref[...]     # [1, H]
    w2 = w2_ref[...]         # [H, M]

    def backbone(x):         # [B, C, P] -> [B, E]
        # 1x1 conv over channels as an unrolled broadcast-MAC over the tiny C
        # axis, vectorized over (batch, spatial); per-channel weight is a plain
        # lane-broadcast of wbb[c] (no in-kernel reshape/transpose).
        h = x[:, 0:1, :] * wbb[0]                       # [B, E, P]
        for c in range(1, C):
            h = h + x[:, c:c + 1, :] * wbb[c]
        h = jnp.maximum(h + bbb, 0.0)                   # bias + ReLU
        return jnp.mean(h, axis=-1)                     # global avg pool -> [B, E]

    # Backbone each view, then stack embeddings so the projector runs ONE dot
    # per layer over 2B rows (instead of 2 tiny dots per layer).
    emb1 = backbone(x1_ref[...])
    emb2 = backbone(x2_ref[...])
    emb = jnp.concatenate([emb1, emb2], axis=0)         # [2B, E]

    # Projector: Linear -> BatchNorm1d (training mode, per-view stats) -> ReLU -> Linear.
    h = jnp.dot(emb, w1, preferred_element_type=jnp.float32) + b1   # [2B, H]

    def bn_core(hh):         # centered (two-pass) variance, eps = 1e-5
        mu = jnp.mean(hh, axis=0, keepdims=True)
        d = hh - mu
        var = jnp.mean(d * d, axis=0, keepdims=True)
        return d * jax.lax.rsqrt(var + 1e-5)

    # BN stats computed separately on each view's B-row half (matches the
    # reference, which calls the projector once per view).
    hn = jnp.concatenate([bn_core(h[:B]), bn_core(h[B:])], axis=0)   # [2B, H]
    a = jnp.maximum(hn * gamma + beta, 0.0)
    pred = jnp.dot(a, w2, preferred_element_type=jnp.float32)        # [2B, M]

    # F.normalize semantics (eps clamp on the squared norm) via rsqrt + mul.
    def l2_normalize(v):     # [2B, D] -> [2B, D]
        ss = jnp.sum(v * v, axis=1, keepdims=True)
        return v * jax.lax.rsqrt(jnp.maximum(ss, 1e-24))

    cos = jnp.sum(l2_normalize(pred) * l2_normalize(emb), axis=1, keepdims=True)  # [2B, 1]
    total = jnp.sum(2.0 - 2.0 * cos, axis=0, keepdims=True)          # [1, 1]
    loss_ref[0, 0] = total[0, 0] / B     # (sum over both views) / B == reference loss.mean()


# ---------------------------------------------------------------------------
# Full BYOL forward: one pallas_call, tiny layout glue on params only.
# ---------------------------------------------------------------------------
def byol_forward(x1_nchw, x2_nchw, params):
    B, C, H, W = x1_nchw.shape
    P = H * W

    # NCHW -> [B, C, P] is a pure reshape (no HBM transpose of the images).
    x1 = x1_nchw.reshape(B, C, P)
    x2 = x2_nchw.reshape(B, C, P)

    # Parameter-side layout fixes (tiny, done once, outside the kernel).
    w_bb = params["w_bb"].reshape(C, -1, 1)      # [C, E, 1]
    b_bb = params["b_bb"].reshape(1, -1, 1)      # [1, E, 1]
    E = w_bb.shape[1]
    M = params["w2"].shape[1]
    assert M == E, "projector output dim must equal embedding dim for the loss"

    loss = pl.pallas_call(
        byol_fused_kernel,
        out_shape=jax.ShapeDtypeStruct((1, 1), jnp.float32),
        in_specs=[VMEM_SPEC] * 9,
        out_specs=SMEM_SPEC,
    )(x1, x2, w_bb, b_bb, params["w1"], params["b1"],
      params["gamma"], params["beta"], params["w2"])
    return loss[0, 0]


if __name__ == "__main__":
    # Small shapes: batch=2, channels=4, spatial=16x16, embedding=32, mlp="64-32"
    B, C, H, W = 2, 4, 16, 16
    EMB, HID, OUT = 32, 64, 32  # OUT must equal EMB for the elementwise loss

    key = jax.random.PRNGKey(0)
    k_x1, k_x2, k_wbb, k_bbb, k_w1, k_b1, k_w2 = jax.random.split(key, 7)

    x1 = jax.random.normal(k_x1, (B, C, H, W), dtype=jnp.float32)
    x2 = jax.random.normal(k_x2, (B, C, H, W), dtype=jnp.float32)

    params = {
        # backbone stand-in (1x1 conv): [C, EMB], bias [1, EMB]
        "w_bb": jax.random.normal(k_wbb, (C, EMB), dtype=jnp.float32) * 0.1,
        "b_bb": jax.random.normal(k_bbb, (1, EMB), dtype=jnp.float32) * 0.01,
        # projector: Linear(EMB->HID) + BN(HID) + ReLU + Linear(HID->OUT, no bias)
        "w1": jax.random.normal(k_w1, (EMB, HID), dtype=jnp.float32) * 0.1,
        "b1": jax.random.normal(k_b1, (1, HID), dtype=jnp.float32) * 0.01,
        "gamma": jnp.ones((1, HID), dtype=jnp.float32),
        "beta": jnp.zeros((1, HID), dtype=jnp.float32),
        "w2": jax.random.normal(k_w2, (HID, OUT), dtype=jnp.float32) * 0.1,
    }

    loss = jax.jit(byol_forward)(x1, x2, params)
    jax.block_until_ready(loss)
    assert loss.shape == (), "loss must be a scalar"
    assert jnp.isfinite(loss), "loss must be finite"
    print("KERNEL_OK")
</pallas_src>

<mosaic_0001>
module attributes {stable_mosaic.version = 11 : i64} {
  func.func @byol_fused_kernel(%arg0: memref<2x4x256xf32, #tpu.memory_space<vmem>>, %arg1: memref<2x4x256xf32, #tpu.memory_space<vmem>>, %arg2: memref<4x32x1xf32, #tpu.memory_space<vmem>>, %arg3: memref<1x32x1xf32, #tpu.memory_space<vmem>>, %arg4: memref<32x64xf32, #tpu.memory_space<vmem>>, %arg5: memref<1x64xf32, #tpu.memory_space<vmem>>, %arg6: memref<1x64xf32, #tpu.memory_space<vmem>>, %arg7: memref<1x64xf32, #tpu.memory_space<vmem>>, %arg8: memref<64x32xf32, #tpu.memory_space<vmem>>, %arg9: memref<1x1xf32, #tpu.memory_space<smem>>) attributes {dimension_semantics = [], scalar_prefetch = 0 : i64, scratch_operands = 0 : i64, tpu.core_type = #tpu.core_type<tc>} {
    %c0 = arith.constant 0 : index
    %c0_0 = arith.constant 0 : index
    %c0_1 = arith.constant 0 : index
    %0 = vector.load %arg2[%c0, %c0_0, %c0_1] : memref<4x32x1xf32, #tpu.memory_space<vmem>>, vector<4x32x1xf32>
    %c0_2 = arith.constant 0 : index
    %c0_3 = arith.constant 0 : index
    %c0_4 = arith.constant 0 : index
    %1 = vector.load %arg3[%c0_2, %c0_3, %c0_4] : memref<1x32x1xf32, #tpu.memory_space<vmem>>, vector<1x32x1xf32>
    %c0_5 = arith.constant 0 : index
    %c0_6 = arith.constant 0 : index
    %2 = vector.load %arg4[%c0_5, %c0_6] : memref<32x64xf32, #tpu.memory_space<vmem>>, vector<32x64xf32>
    %c0_7 = arith.constant 0 : index
    %c0_8 = arith.constant 0 : index
    %3 = vector.load %arg5[%c0_7, %c0_8] : memref<1x64xf32, #tpu.memory_space<vmem>>, vector<1x64xf32>
    %c0_9 = arith.constant 0 : index
    %c0_10 = arith.constant 0 : index
    %4 = vector.load %arg6[%c0_9, %c0_10] : memref<1x64xf32, #tpu.memory_space<vmem>>, vector<1x64xf32>
    %c0_11 = arith.constant 0 : index
    %c0_12 = arith.constant 0 : index
    %5 = vector.load %arg7[%c0_11, %c0_12] : memref<1x64xf32, #tpu.memory_space<vmem>>, vector<1x64xf32>
    %c0_13 = arith.constant 0 : index
    %c0_14 = arith.constant 0 : index
    %6 = vector.load %arg8[%c0_13, %c0_14] : memref<64x32xf32, #tpu.memory_space<vmem>>, vector<64x32xf32>
    %c0_15 = arith.constant 0 : index
    %c0_16 = arith.constant 0 : index
    %c0_17 = arith.constant 0 : index
    %7 = vector.load %arg0[%c0_15, %c0_16, %c0_17] : memref<2x4x256xf32, #tpu.memory_space<vmem>>, vector<2x4x256xf32>
    %8 = vector.extract_strided_slice %7 {offsets = [0, 0, 0], sizes = [2, 1, 256], strides = [1, 1, 1]} : vector<2x4x256xf32> to vector<2x1x256xf32>
    %9 = vector.extract_strided_slice %0 {offsets = [0, 0, 0], sizes = [1, 32, 1], strides = [1, 1, 1]} : vector<4x32x1xf32> to vector<1x32x1xf32>
    %10 = vector.shape_cast %9 : vector<1x32x1xf32> to vector<32x1xf32>
    %11 = vector.shape_cast %10 : vector<32x1xf32> to vector<1x32x1xf32>
    %12 = vector.broadcast %8 : vector<2x1x256xf32> to vector<2x32x256xf32>
    %13 = vector.broadcast %11 : vector<1x32x1xf32> to vector<2x32x256xf32>
    %14 = arith.mulf %12, %13 : vector<2x32x256xf32>
    %15 = vector.extract_strided_slice %7 {offsets = [0, 1, 0], sizes = [2, 1, 256], strides = [1, 1, 1]} : vector<2x4x256xf32> to vector<2x1x256xf32>
    %16 = vector.extract_strided_slice %0 {offsets = [1, 0, 0], sizes = [1, 32, 1], strides = [1, 1, 1]} : vector<4x32x1xf32> to vector<1x32x1xf32>
    %17 = vector.shape_cast %16 : vector<1x32x1xf32> to vector<32x1xf32>
    %18 = vector.shape_cast %17 : vector<32x1xf32> to vector<1x32x1xf32>
    %19 = vector.broadcast %15 : vector<2x1x256xf32> to vector<2x32x256xf32>
    %20 = vector.broadcast %18 : vector<1x32x1xf32> to vector<2x32x256xf32>
    %21 = arith.mulf %19, %20 : vector<2x32x256xf32>
    %22 = arith.addf %14, %21 : vector<2x32x256xf32>
    %23 = vector.extract_strided_slice %7 {offsets = [0, 2, 0], sizes = [2, 1, 256], strides = [1, 1, 1]} : vector<2x4x256xf32> to vector<2x1x256xf32>
    %24 = vector.extract_strided_slice %0 {offsets = [2, 0, 0], sizes = [1, 32, 1], strides = [1, 1, 1]} : vector<4x32x1xf32> to vector<1x32x1xf32>
    %25 = vector.shape_cast %24 : vector<1x32x1xf32> to vector<32x1xf32>
    %26 = vector.shape_cast %25 : vector<32x1xf32> to vector<1x32x1xf32>
    %27 = vector.broadcast %23 : vector<2x1x256xf32> to vector<2x32x256xf32>
    %28 = vector.broadcast %26 : vector<1x32x1xf32> to vector<2x32x256xf32>
    %29 = arith.mulf %27, %28 : vector<2x32x256xf32>
    %30 = arith.addf %22, %29 : vector<2x32x256xf32>
    %31 = vector.extract_strided_slice %7 {offsets = [0, 3, 0], sizes = [2, 1, 256], strides = [1, 1, 1]} : vector<2x4x256xf32> to vector<2x1x256xf32>
    %32 = vector.extract_strided_slice %0 {offsets = [3, 0, 0], sizes = [1, 32, 1], strides = [1, 1, 1]} : vector<4x32x1xf32> to vector<1x32x1xf32>
    %33 = vector.shape_cast %32 : vector<1x32x1xf32> to vector<32x1xf32>
    %34 = vector.shape_cast %33 : vector<32x1xf32> to vector<1x32x1xf32>
    %35 = vector.broadcast %31 : vector<2x1x256xf32> to vector<2x32x256xf32>
    %36 = vector.broadcast %34 : vector<1x32x1xf32> to vector<2x32x256xf32>
    %37 = arith.mulf %35, %36 : vector<2x32x256xf32>
    %38 = arith.addf %30, %37 : vector<2x32x256xf32>
    %39 = vector.broadcast %1 : vector<1x32x1xf32> to vector<2x32x256xf32>
    %40 = arith.addf %38, %39 : vector<2x32x256xf32>
    %cst = arith.constant 0.000000e+00 : f32
    %41 = vector.broadcast %cst : f32 to vector<2x32x256xf32>
    %42 = arith.maximumf %40, %41 : vector<2x32x256xf32>
    %cst_18 = arith.constant dense<0.000000e+00> : vector<2x32xf32>
    %43 = vector.multi_reduction <add>, %42, %cst_18 [2] : vector<2x32x256xf32> to vector<2x32xf32>
    %cst_19 = arith.constant 2.560000e+02 : f32
    %44 = vector.broadcast %cst_19 : f32 to vector<2x32xf32>
    %45 = arith.divf %43, %44 : vector<2x32xf32>
    %c0_20 = arith.constant 0 : index
    %c0_21 = arith.constant 0 : index
    %c0_22 = arith.constant 0 : index
    %46 = vector.load %arg1[%c0_20, %c0_21, %c0_22] : memref<2x4x256xf32, #tpu.memory_space<vmem>>, vector<2x4x256xf32>
    %47 = vector.extract_strided_slice %46 {offsets = [0, 0, 0], sizes = [2, 1, 256], strides = [1, 1, 1]} : vector<2x4x256xf32> to vector<2x1x256xf32>
    %48 = vector.extract_strided_slice %0 {offsets = [0, 0, 0], sizes = [1, 32, 1], strides = [1, 1, 1]} : vector<4x32x1xf32> to vector<1x32x1xf32>
    %49 = vector.shape_cast %48 : vector<1x32x1xf32> to vector<32x1xf32>
    %50 = vector.shape_cast %49 : vector<32x1xf32> to vector<1x32x1xf32>
    %51 = vector.broadcast %47 : vector<2x1x256xf32> to vector<2x32x256xf32>
    %52 = vector.broadcast %50 : vector<1x32x1xf32> to vector<2x32x256xf32>
    %53 = arith.mulf %51, %52 : vector<2x32x256xf32>
    %54 = vector.extract_strided_slice %46 {offsets = [0, 1, 0], sizes = [2, 1, 256], strides = [1, 1, 1]} : vector<2x4x256xf32> to vector<2x1x256xf32>
    %55 = vector.extract_strided_slice %0 {offsets = [1, 0, 0], sizes = [1, 32, 1], strides = [1, 1, 1]} : vector<4x32x1xf32> to vector<1x32x1xf32>
    %56 = vector.shape_cast %55 : vector<1x32x1xf32> to vector<32x1xf32>
    %57 = vector.shape_cast %56 : vector<32x1xf32> to vector<1x32x1xf32>
    %58 = vector.broadcast %54 : vector<2x1x256xf32> to vector<2x32x256xf32>
    %59 = vector.broadcast %57 : vector<1x32x1xf32> to vector<2x32x256xf32>
    %60 = arith.mulf %58, %59 : vector<2x32x256xf32>
    %61 = arith.addf %53, %60 : vector<2x32x256xf32>
    %62 = vector.extract_strided_slice %46 {offsets = [0, 2, 0], sizes = [2, 1, 256], strides = [1, 1, 1]} : vector<2x4x256xf32> to vector<2x1x256xf32>
    %63 = vector.extract_strided_slice %0 {offsets = [2, 0, 0], sizes = [1, 32, 1], strides = [1, 1, 1]} : vector<4x32x1xf32> to vector<1x32x1xf32>
    %64 = vector.shape_cast %63 : vector<1x32x1xf32> to vector<32x1xf32>
    %65 = vector.shape_cast %64 : vector<32x1xf32> to vector<1x32x1xf32>
    %66 = vector.broadcast %62 : vector<2x1x256xf32> to vector<2x32x256xf32>
    %67 = vector.broadcast %65 : vector<1x32x1xf32> to vector<2x32x256xf32>
    %68 = arith.mulf %66, %67 : vector<2x32x256xf32>
    %69 = arith.addf %61, %68 : vector<2x32x256xf32>
    %70 = vector.extract_strided_slice %46 {offsets = [0, 3, 0], sizes = [2, 1, 256], strides = [1, 1, 1]} : vector<2x4x256xf32> to vector<2x1x256xf32>
    %71 = vector.extract_strided_slice %0 {offsets = [3, 0, 0], sizes = [1, 32, 1], strides = [1, 1, 1]} : vector<4x32x1xf32> to vector<1x32x1xf32>
    %72 = vector.shape_cast %71 : vector<1x32x1xf32> to vector<32x1xf32>
    %73 = vector.shape_cast %72 : vector<32x1xf32> to vector<1x32x1xf32>
    %74 = vector.broadcast %70 : vector<2x1x256xf32> to vector<2x32x256xf32>
    %75 = vector.broadcast %73 : vector<1x32x1xf32> to vector<2x32x256xf32>
    %76 = arith.mulf %74, %75 : vector<2x32x256xf32>
    %77 = arith.addf %69, %76 : vector<2x32x256xf32>
    %78 = vector.broadcast %1 : vector<1x32x1xf32> to vector<2x32x256xf32>
    %79 = arith.addf %77, %78 : vector<2x32x256xf32>
    %cst_23 = arith.constant 0.000000e+00 : f32
    %80 = vector.broadcast %cst_23 : f32 to vector<2x32x256xf32>
    %81 = arith.maximumf %79, %80 : vector<2x32x256xf32>
    %cst_24 = arith.constant dense<0.000000e+00> : vector<2x32xf32>
    %82 = vector.multi_reduction <add>, %81, %cst_24 [2] : vector<2x32x256xf32> to vector<2x32xf32>
    %cst_25 = arith.constant 2.560000e+02 : f32
    %83 = vector.broadcast %cst_25 : f32 to vector<2x32xf32>
    %84 = arith.divf %82, %83 : vector<2x32xf32>
    %85 = tpu.concatenate %45, %84 in 0 : vector<2x32xf32>, vector<2x32xf32> -> vector<4x32xf32>
    %cst_26 = arith.constant dense<0.000000e+00> : vector<4x64xf32>
    %86 = tpu.matmul %85, %2, %cst_26 {dimension_numbers = #tpu.dot_dimension_numbers<[1], [0], [0], [1], [0, 0, 1, 1], [], []>} : vector<4x32xf32>, vector<32x64xf32>, vector<4x64xf32> -> vector<4x64xf32>
    %87 = vector.broadcast %3 : vector<1x64xf32> to vector<4x64xf32>
    %88 = arith.addf %86, %87 : vector<4x64xf32>
    %89 = vector.extract_strided_slice %88 {offsets = [0, 0], sizes = [2, 64], strides = [1, 1]} : vector<4x64xf32> to vector<2x64xf32>
    %cst_27 = arith.constant dense<0.000000e+00> : vector<64xf32>
    %90 = vector.multi_reduction <add>, %89, %cst_27 [0] : vector<2x64xf32> to vector<64xf32>
    %91 = vector.shape_cast %90 : vector<64xf32> to vector<1x64xf32>
    %cst_28 = arith.constant 2.000000e+00 : f32
    %92 = vector.broadcast %cst_28 : f32 to vector<1x64xf32>
    %93 = arith.divf %91, %92 : vector<1x64xf32>
    %94 = vector.broadcast %93 : vector<1x64xf32> to vector<2x64xf32>
    %95 = arith.subf %89, %94 : vector<2x64xf32>
    %96 = arith.mulf %95, %95 : vector<2x64xf32>
    %cst_29 = arith.constant dense<0.000000e+00> : vector<64xf32>
    %97 = vector.multi_reduction <add>, %96, %cst_29 [0] : vector<2x64xf32> to vector<64xf32>
    %98 = vector.shape_cast %97 : vector<64xf32> to vector<1x64xf32>
    %cst_30 = arith.constant 2.000000e+00 : f32
    %99 = vector.broadcast %cst_30 : f32 to vector<1x64xf32>
    %100 = arith.divf %98, %99 : vector<1x64xf32>
    %cst_31 = arith.constant 9.99999974E-6 : f32
    %101 = vector.broadcast %cst_31 : f32 to vector<1x64xf32>
    %102 = arith.addf %100, %101 : vector<1x64xf32>
    %103 = math.rsqrt %102 : vector<1x64xf32>
    %104 = vector.broadcast %103 : vector<1x64xf32> to vector<2x64xf32>
    %105 = arith.mulf %95, %104 : vector<2x64xf32>
    %106 = vector.extract_strided_slice %88 {offsets = [2, 0], sizes = [2, 64], strides = [1, 1]} : vector<4x64xf32> to vector<2x64xf32>
    %cst_32 = arith.constant dense<0.000000e+00> : vector<64xf32>
    %107 = vector.multi_reduction <add>, %106, %cst_32 [0] : vector<2x64xf32> to vector<64xf32>
    %108 = vector.shape_cast %107 : vector<64xf32> to vector<1x64xf32>
    %cst_33 = arith.constant 2.000000e+00 : f32
    %109 = vector.broadcast %cst_33 : f32 to vector<1x64xf32>
    %110 = arith.divf %108, %109 : vector<1x64xf32>
    %111 = vector.broadcast %110 : vector<1x64xf32> to vector<2x64xf32>
    %112 = arith.subf %106, %111 : vector<2x64xf32>
    %113 = arith.mulf %112, %112 : vector<2x64xf32>
    %cst_34 = arith.constant dense<0.000000e+00> : vector<64xf32>
    %114 = vector.multi_reduction <add>, %113, %cst_34 [0] : vector<2x64xf32> to vector<64xf32>
    %115 = vector.shape_cast %114 : vector<64xf32> to vector<1x64xf32>
    %cst_35 = arith.constant 2.000000e+00 : f32
    %116 = vector.broadcast %cst_35 : f32 to vector<1x64xf32>
    %117 = arith.divf %115, %116 : vector<1x64xf32>
    %cst_36 = arith.constant 9.99999974E-6 : f32
    %118 = vector.broadcast %cst_36 : f32 to vector<1x64xf32>
    %119 = arith.addf %117, %118 : vector<1x64xf32>
    %120 = math.rsqrt %119 : vector<1x64xf32>
    %121 = vector.broadcast %120 : vector<1x64xf32> to vector<2x64xf32>
    %122 = arith.mulf %112, %121 : vector<2x64xf32>
    %123 = tpu.concatenate %105, %122 in 0 : vector<2x64xf32>, vector<2x64xf32> -> vector<4x64xf32>
    %124 = vector.broadcast %4 : vector<1x64xf32> to vector<4x64xf32>
    %125 = arith.mulf %123, %124 : vector<4x64xf32>
    %126 = vector.broadcast %5 : vector<1x64xf32> to vector<4x64xf32>
    %127 = arith.addf %125, %126 : vector<4x64xf32>
    %cst_37 = arith.constant 0.000000e+00 : f32
    %128 = vector.broadcast %cst_37 : f32 to vector<4x64xf32>
    %129 = arith.maximumf %127, %128 : vector<4x64xf32>
    %cst_38 = arith.constant dense<0.000000e+00> : vector<4x32xf32>
    %130 = tpu.matmul %129, %6, %cst_38 {dimension_numbers = #tpu.dot_dimension_numbers<[1], [0], [0], [1], [0, 0, 1, 1], [], []>} : vector<4x64xf32>, vector<64x32xf32>, vector<4x32xf32> -> vector<4x32xf32>
    %131 = arith.mulf %130, %130 : vector<4x32xf32>
    %cst_39 = arith.constant dense<0.000000e+00> : vector<4xf32>
    %132 = vector.multi_reduction <add>, %131, %cst_39 [1] : vector<4x32xf32> to vector<4xf32>
    %133 = vector.shape_cast %132 : vector<4xf32> to vector<4x1xf32>
    %cst_40 = arith.constant 1.000000e-24 : f32
    %134 = vector.broadcast %cst_40 : f32 to vector<4x1xf32>
    %135 = arith.maximumf %133, %134 : vector<4x1xf32>
    %136 = math.rsqrt %135 : vector<4x1xf32>
    %137 = vector.broadcast %136 : vector<4x1xf32> to vector<4x32xf32>
    %138 = arith.mulf %130, %137 : vector<4x32xf32>
    %139 = arith.mulf %85, %85 : vector<4x32xf32>
    %cst_41 = arith.constant dense<0.000000e+00> : vector<4xf32>
    %140 = vector.multi_reduction <add>, %139, %cst_41 [1] : vector<4x32xf32> to vector<4xf32>
    %141 = vector.shape_cast %140 : vector<4xf32> to vector<4x1xf32>
    %cst_42 = arith.constant 1.000000e-24 : f32
    %142 = vector.broadcast %cst_42 : f32 to vector<4x1xf32>
    %143 = arith.maximumf %141, %142 : vector<4x1xf32>
    %144 = math.rsqrt %143 : vector<4x1xf32>
    %145 = vector.broadcast %144 : vector<4x1xf32> to vector<4x32xf32>
    %146 = arith.mulf %85, %145 : vector<4x32xf32>
    %147 = arith.mulf %138, %146 : vector<4x32xf32>
    %cst_43 = arith.constant dense<0.000000e+00> : vector<4xf32>
    %148 = vector.multi_reduction <add>, %147, %cst_43 [1] : vector<4x32xf32> to vector<4xf32>
    %149 = vector.shape_cast %148 : vector<4xf32> to vector<4x1xf32>
    %cst_44 = arith.constant 2.000000e+00 : f32
    %150 = vector.broadcast %cst_44 : f32 to vector<4x1xf32>
    %151 = arith.mulf %150, %149 : vector<4x1xf32>
    %cst_45 = arith.constant 2.000000e+00 : f32
    %152 = vector.broadcast %cst_45 : f32 to vector<4x1xf32>
    %153 = arith.subf %152, %151 : vector<4x1xf32>
    %cst_46 = arith.constant dense<0.000000e+00> : vector<1xf32>
    %154 = vector.multi_reduction <add>, %153, %cst_46 [0] : vector<4x1xf32> to vector<1xf32>
    %155 = vector.shape_cast %154 : vector<1xf32> to vector<1x1xf32>
    %156 = vector.extract %155[0, 0] : f32 from vector<1x1xf32>
    %cst_47 = arith.constant 2.000000e+00 : f32
    %157 = arith.divf %156, %cst_47 : f32
    %c0_48 = arith.constant 0 : index
    %c0_49 = arith.constant 0 : index
    %158 = memref.load %arg9[%c0_48, %c0_49] : memref<1x1xf32, #tpu.memory_space<smem>>
    memref.store %157, %arg9[%c0_48, %c0_49] : memref<1x1xf32, #tpu.memory_space<smem>>
    return
  }
}

</mosaic_0001>

<llo_original>
// kernel: byol_forward.1
$region0: #{byol_forward.1}
  #allocation0 [shape = 'u32[]', space=smem, size = 0x4, offset = 0x4, fixed_abs, tag = 'smem constant byte address 0x4 - core index']
  #allocation1 [shape = 'u32[144,128]{1,0:T(1,128)}', space=vmem, size = 0x12000, scoped, tag = 'internal scratch']
  %s0 = inlined_call_operand.vmem [shape: f32[2,4,256], index: 0, kind: input, shape index: {}]
  %s1 = inlined_call_operand.vmem [shape: f32[2,4,256], index: 1, kind: input, shape index: {}]
  %s2 = inlined_call_operand.vmem [shape: f32[4,32,1], index: 2, kind: input, shape index: {}]
  %s3 = inlined_call_operand.vmem [shape: f32[1,32,1], index: 3, kind: input, shape index: {}]
  %s4 = inlined_call_operand.vmem [shape: f32[32,64], index: 4, kind: input, shape index: {}]
  %s5 = inlined_call_operand.vmem [shape: f32[1,64], index: 5, kind: input, shape index: {}]
  %s6 = inlined_call_operand.vmem [shape: f32[1,64], index: 6, kind: input, shape index: {}]
  %s7 = inlined_call_operand.vmem [shape: f32[1,64], index: 7, kind: input, shape index: {}]
  %s8 = inlined_call_operand.vmem [shape: f32[64,32], index: 8, kind: input, shape index: {}]
  %s9 = inlined_call_operand.hbm [shape: f32[1,1], index: 9, kind: output, shape index: {}]
  %s10 = sld [smem:[#allocation0]]
  $region46: #{byol_forward.1} parent=0
    _
  %s12 = ssub.s32 1, %s10
  %s13 = scalar_select 0, %s12, %s10
  $region1: #{byol_forward.1} parent=0
    #allocation2 [shape = 'u8[512]{0}', space=smem, size = 0x200, scoped, tag = 'output window, operand 0, single buffered']
    #allocation3 [shape = 's32[1]{0}', space=sflag, size = 0x4, scoped, tag = 'scoped memory for byol_forward.1']
    %14 = vsyncpa [#allocation3], 0
    // Predicated region
    $region2: #{byol_forward.1} parent=1 // pred_check
      _
    $region3: #{byol_forward.1} parent=1 // pred_check_branch
      %16 = sbr.rel (0) target = $region5
    $region4: #{byol_forward.1} parent=1 // pred_region
      _
    $region5: #{byol_forward.1} parent=1 // pred_fallthru
      _
    // Predicated region
    $region6: #{byol_forward.1} parent=1 // pred_check
      _
    $region7: #{byol_forward.1} parent=1 // pred_check_branch
      %18 = sbr.rel (0) target = $region9
    $region8: #{byol_forward.1} parent=1 // pred_region
      _
    $region9: #{byol_forward.1} parent=1 // pred_fallthru
      _
    // Predicated region
    $region10: #{byol_forward.1} parent=1 // pred_check
      _
    $region11: #{byol_forward.1} parent=1 // pred_check_branch
      %20 = sbr.rel (0) target = $region13
    $region12: #{byol_forward.1} parent=1 // pred_region
      _
    $region13: #{byol_forward.1} parent=1 // pred_fallthru
      _
    // Predicated region
    $region14: #{byol_forward.1} parent=1 // pred_check
      _
    $region15: #{byol_forward.1} parent=1 // pred_check_branch
      %22 = sbr.rel (0) target = $region17
    $region16: #{byol_forward.1} parent=1 // pred_region
      _
    $region17: #{byol_forward.1} parent=1 // pred_fallthru
      _
    // Predicated region
    $region18: #{byol_forward.1} parent=1 // pred_check
      _
    $region19: #{byol_forward.1} parent=1 // pred_check_branch
      %24 = sbr.rel (0) target = $region21
    $region20: #{byol_forward.1} parent=1 // pred_region
      _
    $region21: #{byol_forward.1} parent=1 // pred_fallthru
      _
    // Predicated region
    $region22: #{byol_forward.1} parent=1 // pred_check
      _
    $region23: #{byol_forward.1} parent=1 // pred_check_branch
      %26 = sbr.rel (0) target = $region25
    $region24: #{byol_forward.1} parent=1 // pred_region
      _
    $region25: #{byol_forward.1} parent=1 // pred_fallthru
      _
    // Predicated region
    $region26: #{byol_forward.1} parent=1 // pred_check
      _
    $region27: #{byol_forward.1} parent=1 // pred_check_branch
      %28 = sbr.rel (0) target = $region29
    $region28: #{byol_forward.1} parent=1 // pred_region
      _
    $region29: #{byol_forward.1} parent=1 // pred_fallthru
      _
    // Predicated region
    $region30: #{byol_forward.1} parent=1 // pred_check
      _
    $region31: #{byol_forward.1} parent=1 // pred_check_branch
      %30 = sbr.rel (0) target = $region33
    $region32: #{byol_forward.1} parent=1 // pred_region
      _
    $region33: #{byol_forward.1} parent=1 // pred_fallthru
      _
    // Predicated region
    $region34: #{byol_forward.1} parent=1 // pred_check
      _
    $region35: #{byol_forward.1} parent=1 // pred_check_branch
      %32 = sbr.rel (0) target = $region37
    $region36: #{byol_forward.1} parent=1 // pred_region
      _
    $region37: #{byol_forward.1} parent=1 // pred_fallthru
      _
    %v33 = vld [vmem:[%s2] sm:$0xff]
    %v34 = vld [vmem:[%s2 + $0x8] sm:$0xff]
    %v35 = vld [vmem:[%s2 + $0x10] sm:$0xff]
    %v36 = vld [vmem:[%s2 + $0x18] sm:$0xff]
    %v37 = vld [vmem:[%s2 + $0x20] sm:$0xff]
    %v38 = vld [vmem:[%s2 + $0x28] sm:$0xff]
    %v39 = vld [vmem:[%s2 + $0x30] sm:$0xff]
    %v40 = vld [vmem:[%s2 + $0x38] sm:$0xff]
    %v41 = vld [vmem:[%s2 + $0x40] sm:$0xff]
    %v42 = vld [vmem:[%s2 + $0x48] sm:$0xff]
    %v43 = vld [vmem:[%s2 + $0x50] sm:$0xff]
    %v44 = vld [vmem:[%s2 + $0x58] sm:$0xff]
    %v45 = vld [vmem:[%s2 + $0x60] sm:$0xff]
    %v46 = vld [vmem:[%s2 + $0x68] sm:$0xff]
    %v47 = vld [vmem:[%s2 + $0x70] sm:$0xff]
    %v48 = vld [vmem:[%s2 + $0x78] sm:$0xff]
    %v49 = vld [vmem:[%s3] sm:$0xff]
    %v50 = vld [vmem:[%s3 + $0x8] sm:$0xff]
    %v51 = vld [vmem:[%s3 + $0x10] sm:$0xff]
    %v52 = vld [vmem:[%s3 + $0x18] sm:$0xff]
    %v53 = vld [vmem:[%s4] sm:$0xff]
    %v54 = vld [vmem:[%s4 + $0x8] sm:$0xff]
    %v55 = vld [vmem:[%s4 + $0x10] sm:$0xff]
    %v56 = vld [vmem:[%s4 + $0x18] sm:$0xff]
    %v57 = vld [vmem:[%s5] sm:$0x1]
    %v58 = vld [vmem:[%s6] sm:$0x1]
    %v59 = vld [vmem:[%s7] sm:$0x1]
    %v60 = vld [vmem:[%s8] sm:$0xff]
    %v61 = vld [vmem:[%s8 + $0x8] sm:$0xff]
    %v62 = vld [vmem:[%s8 + $0x10] sm:$0xff]
    %v63 = vld [vmem:[%s8 + $0x18] sm:$0xff]
    %v64 = vld [vmem:[%s8 + $0x20] sm:$0xff]
    %v65 = vld [vmem:[%s8 + $0x28] sm:$0xff]
    %v66 = vld [vmem:[%s8 + $0x30] sm:$0xff]
    %v67 = vld [vmem:[%s8 + $0x38] sm:$0xff]
    %v68 = vld [vmem:[%s0] sm:$0xff]
    %v69 = vld [vmem:[%s0 + $0x8] sm:$0xff]
    %v72 = vlaneseq
    %v73 = vshrl.u32 %v72, 7
    %v74 = vsub.s32 0, %v73
    %v75 = vrot.slane %v68, %v74
    %v76 = vlaneseq
    %v77 = vshrl.u32 %v76, 7
    %v78 = vsub.s32 4, %v77
    %v79 = vrot.slane %v68, %v78
    %v80 = vlaneseq
    %v81 = vshrl.u32 %v80, 7
    %v82 = vsub.s32 0, %v81
    %v83 = vrot.slane %v69, %v82
    %v84 = vlaneseq
    %v85 = vshrl.u32 %v84, 7
    %v86 = vsub.s32 4, %v85
    %v87 = vrot.slane %v69, %v86
    %v92 = vlaneseq
    %v93 = vshrl.u32 %v92, 7
    %v94 = vsub.s32 0, %v93
    %v95 = vrot.slane %v75, %v94
    %v96 = vlaneseq
    %v97 = vshrl.u32 %v96, 7
    %v98 = vsub.s32 0, %v97
    %v99 = vrot.slane %v79, %v98
    %v100 = vlaneseq
    %v101 = vshrl.u32 %v100, 7
    %v102 = vsub.s32 0, %v101
    %v103 = vrot.slane %v83, %v102
    %v104 = vlaneseq
    %v105 = vshrl.u32 %v104, 7
    %v106 = vsub.s32 0, %v105
    %v107 = vrot.slane %v87, %v106
    %109 = vset.pattern.permute.xlu0 0
    %110 = vperm.xlu0 %109, %v33
    %v111 = vpop.permute.xlu0 %110
    %114 = vset.pattern.permute.xlu0 0
    %115 = vperm.xlu0 %114, %v34
    %v116 = vpop.permute.xlu0 %115
    %119 = vset.pattern.permute.xlu0 0
    %120 = vperm.xlu0 %119, %v35
    %v121 = vpop.permute.xlu0 %120
    %124 = vset.pattern.permute.xlu0 0
    %125 = vperm.xlu0 %124, %v36
    %v126 = vpop.permute.xlu0 %125
    %v128 = vmul.f32 %v95, %v111
    %v129 = vmul.f32 %v99, %v111
    %v130 = vmul.f32 %v95, %v116
    %v131 = vmul.f32 %v99, %v116
    %v132 = vmul.f32 %v95, %v121
    %v133 = vmul.f32 %v99, %v121
    %v134 = vmul.f32 %v95, %v126
    %v135 = vmul.f32 %v99, %v126
    %v136 = vmul.f32 %v103, %v111
    %v137 = vmul.f32 %v107, %v111
    %v138 = vmul.f32 %v103, %v116
    %v139 = vmul.f32 %v107, %v116
    %v140 = vmul.f32 %v103, %v121
    %v141 = vmul.f32 %v107, %v121
    %v142 = vmul.f32 %v103, %v126
    %v143 = vmul.f32 %v107, %v126
    %v144 = vlaneseq
    %v145 = vshrl.u32 %v144, 7
    %v146 = vsub.s32 1, %v145
    %v147 = vrot.slane %v68, %v146
    %v148 = vlaneseq
    %v149 = vshrl.u32 %v148, 7
    %v150 = vsub.s32 5, %v149
    %v151 = vrot.slane %v68, %v150
    %v152 = vlaneseq
    %v153 = vshrl.u32 %v152, 7
    %v154 = vsub.s32 1, %v153
    %v155 = vrot.slane %v69, %v154
    %v156 = vlaneseq
    %v157 = vshrl.u32 %v156, 7
    %v158 = vsub.s32 5, %v157
    %v159 = vrot.slane %v69, %v158
    %v164 = vlaneseq
    %v165 = vshrl.u32 %v164, 7
    %v166 = vsub.s32 1, %v165
    %v167 = vrot.slane %v147, %v166
    %v168 = vlaneseq
    %v169 = vshrl.u32 %v168, 7
    %v170 = vsub.s32 1, %v169
    %v171 = vrot.slane %v151, %v170
    %v172 = vlaneseq
    %v173 = vshrl.u32 %v172, 7
    %v174 = vsub.s32 1, %v173
    %v175 = vrot.slane %v155, %v174
    %v176 = vlaneseq
    %v177 = vshrl.u32 %v176, 7
    %v178 = vsub.s32 1, %v177
    %v179 = vrot.slane %v159, %v178
    %181 = vset.pattern.permute.xlu0 0
    %182 = vperm.xlu0 %181, %v37
    %v183 = vpop.permute.xlu0 %182
    %186 = vset.pattern.permute.xlu0 0
    %187 = vperm.xlu0 %186, %v38
    %v188 = vpop.permute.xlu0 %187
    %191 = vset.pattern.permute.xlu0 0
    %192 = vperm.xlu0 %191, %v39
    %v193 = vpop.permute.xlu0 %192
    %196 = vset.pattern.permute.xlu0 0
    %197 = vperm.xlu0 %196, %v40
    %v198 = vpop.permute.xlu0 %197
    %v200 = vmul.f32 %v167, %v183
    %v201 = vmul.f32 %v171, %v183
    %v202 = vmul.f32 %v167, %v188
    %v203 = vmul.f32 %v171, %v188
    %v204 = vmul.f32 %v167, %v193
    %v205 = vmul.f32 %v171, %v193
    %v206 = vmul.f32 %v167, %v198
    %v207 = vmul.f32 %v171, %v198
    %v208 = vmul.f32 %v175, %v183
    %v209 = vmul.f32 %v179, %v183
    %v210 = vmul.f32 %v175, %v188
    %v211 = vmul.f32 %v179, %v188
    %v212 = vmul.f32 %v175, %v193
    %v213 = vmul.f32 %v179, %v193
    %v214 = vmul.f32 %v175, %v198
    %v215 = vmul.f32 %v179, %v198
    %v216 = vadd.f32 %v128, %v200
    %v217 = vadd.f32 %v129, %v201
    %v218 = vadd.f32 %v130, %v202
    %v219 = vadd.f32 %v131, %v203
    %v220 = vadd.f32 %v132, %v204
    %v221 = vadd.f32 %v133, %v205
    %v222 = vadd.f32 %v134, %v206
    %v223 = vadd.f32 %v135, %v207
    %v224 = vadd.f32 %v136, %v208
    %v225 = vadd.f32 %v137, %v209
    %v226 = vadd.f32 %v138, %v210
    %v227 = vadd.f32 %v139, %v211
    %v228 = vadd.f32 %v140, %v212
    %v229 = vadd.f32 %v141, %v213
    %v230 = vadd.f32 %v142, %v214
    %v231 = vadd.f32 %v143, %v215
    %v232 = vlaneseq
    %v233 = vshrl.u32 %v232, 7
    %v234 = vsub.s32 2, %v233
    %v235 = vrot.slane %v68, %v234
    %v236 = vlaneseq
    %v237 = vshrl.u32 %v236, 7
    %v238 = vsub.s32 6, %v237
    %v239 = vrot.slane %v68, %v238
    %v240 = vlaneseq
    %v241 = vshrl.u32 %v240, 7
    %v242 = vsub.s32 2, %v241
    %v243 = vrot.slane %v69, %v242
    %v244 = vlaneseq
    %v245 = vshrl.u32 %v244, 7
    %v246 = vsub.s32 6, %v245
    %v247 = vrot.slane %v69, %v246
    %v252 = vlaneseq
    %v253 = vshrl.u32 %v252, 7
    %v254 = vsub.s32 2, %v253
    %v255 = vrot.slane %v235, %v254
    %v256 = vlaneseq
    %v257 = vshrl.u32 %v256, 7
    %v258 = vsub.s32 2, %v257
    %v259 = vrot.slane %v239, %v258
    %v260 = vlaneseq
    %v261 = vshrl.u32 %v260, 7
    %v262 = vsub.s32 2, %v261
    %v263 = vrot.slane %v243, %v262
    %v264 = vlaneseq
    %v265 = vshrl.u32 %v264, 7
    %v266 = vsub.s32 2, %v265
    %v267 = vrot.slane %v247, %v266
    %269 = vset.pattern.permute.xlu0 0
    %270 = vperm.xlu0 %269, %v41
    %v271 = vpop.permute.xlu0 %270
    %274 = vset.pattern.permute.xlu0 0
    %275 = vperm.xlu0 %274, %v42
    %v276 = vpop.permute.xlu0 %275
    %279 = vset.pattern.permute.xlu0 0
    %280 = vperm.xlu0 %279, %v43
    %v281 = vpop.permute.xlu0 %280
    %284 = vset.pattern.permute.xlu0 0
    %285 = vperm.xlu0 %284, %v44
    %v286 = vpop.permute.xlu0 %285
    %v288 = vmul.f32 %v255, %v271
    %v289 = vmul.f32 %v259, %v271
    %v290 = vmul.f32 %v255, %v276
    %v291 = vmul.f32 %v259, %v276
    %v292 = vmul.f32 %v255, %v281
    %v293 = vmul.f32 %v259, %v281
    %v294 = vmul.f32 %v255, %v286
    %v295 = vmul.f32 %v259, %v286
    %v296 = vmul.f32 %v263, %v271
    %v297 = vmul.f32 %v267, %v271
    %v298 = vmul.f32 %v263, %v276
    %v299 = vmul.f32 %v267, %v276
    %v300 = vmul.f32 %v263, %v281
    %v301 = vmul.f32 %v267, %v281
    %v302 = vmul.f32 %v263, %v286
    %v303 = vmul.f32 %v267, %v286
    %v304 = vadd.f32 %v216, %v288
    %v305 = vadd.f32 %v217, %v289
    %v306 = vadd.f32 %v218, %v290
    %v307 = vadd.f32 %v219, %v291
    %v308 = vadd.f32 %v220, %v292
    %v309 = vadd.f32 %v221, %v293
    %v310 = vadd.f32 %v222, %v294
    %v311 = vadd.f32 %v223, %v295
    %v312 = vadd.f32 %v224, %v296
    %v313 = vadd.f32 %v225, %v297
    %v314 = vadd.f32 %v226, %v298
    %v315 = vadd.f32 %v227, %v299
    %v316 = vadd.f32 %v228, %v300
    %v317 = vadd.f32 %v229, %v301
    %v318 = vadd.f32 %v230, %v302
    %v319 = vadd.f32 %v231, %v303
    %v320 = vlaneseq
    %v321 = vshrl.u32 %v320, 7
    %v322 = vsub.s32 3, %v321
    %v323 = vrot.slane %v68, %v322
    %v324 = vlaneseq
    %v325 = vshrl.u32 %v324, 7
    %v326 = vsub.s32 7, %v325
    %v327 = vrot.slane %v68, %v326
    %v328 = vlaneseq
    %v329 = vshrl.u32 %v328, 7
    %v330 = vsub.s32 3, %v329
    %v331 = vrot.slane %v69, %v330
    %v332 = vlaneseq
    %v333 = vshrl.u32 %v332, 7
    %v334 = vsub.s32 7, %v333
    %v335 = vrot.slane %v69, %v334
    %v340 = vlaneseq
    %v341 = vshrl.u32 %v340, 7
    %v342 = vsub.s32 3, %v341
    %v343 = vrot.slane %v323, %v342
    %v344 = vlaneseq
    %v345 = vshrl.u32 %v344, 7
    %v346 = vsub.s32 3, %v345
    %v347 = vrot.slane %v327, %v346
    %v348 = vlaneseq
    %v349 = vshrl.u32 %v348, 7
    %v350 = vsub.s32 3, %v349
    %v351 = vrot.slane %v331, %v350
    %v352 = vlaneseq
    %v353 = vshrl.u32 %v352, 7
    %v354 = vsub.s32 3, %v353
    %v355 = vrot.slane %v335, %v354
    %357 = vset.pattern.permute.xlu0 0
    %358 = vperm.xlu0 %357, %v45
    %v359 = vpop.permute.xlu0 %358
    %362 = vset.pattern.permute.xlu0 0
    %363 = vperm.xlu0 %362, %v46
    %v364 = vpop.permute.xlu0 %363
    %367 = vset.pattern.permute.xlu0 0
    %368 = vperm.xlu0 %367, %v47
    %v369 = vpop.permute.xlu0 %368
    %372 = vset.pattern.permute.xlu0 0
    %373 = vperm.xlu0 %372, %v48
    %v374 = vpop.permute.xlu0 %373
    %v376 = vmul.f32 %v343, %v359
    %v377 = vmul.f32 %v347, %v359
    %v378 = vmul.f32 %v343, %v364
    %v379 = vmul.f32 %v347, %v364
    %v380 = vmul.f32 %v343, %v369
    %v381 = vmul.f32 %v347, %v369
    %v382 = vmul.f32 %v343, %v374
    %v383 = vmul.f32 %v347, %v374
    %v384 = vmul.f32 %v351, %v359
    %v385 = vmul.f32 %v355, %v359
    %v386 = vmul.f32 %v351, %v364
    %v387 = vmul.f32 %v355, %v364
    %v388 = vmul.f32 %v351, %v369
    %v389 = vmul.f32 %v355, %v369
    %v390 = vmul.f32 %v351, %v374
    %v391 = vmul.f32 %v355, %v374
    %v392 = vadd.f32 %v304, %v376
    %v393 = vadd.f32 %v305, %v377
    %v394 = vadd.f32 %v306, %v378
    %v395 = vadd.f32 %v307, %v379
    %v396 = vadd.f32 %v308, %v380
    %v397 = vadd.f32 %v309, %v381
    %v398 = vadd.f32 %v310, %v382
    %v399 = vadd.f32 %v311, %v383
    %v400 = vadd.f32 %v312, %v384
    %v401 = vadd.f32 %v313, %v385
    %v402 = vadd.f32 %v314, %v386
    %v403 = vadd.f32 %v315, %v387
    %v404 = vadd.f32 %v316, %v388
    %v405 = vadd.f32 %v317, %v389
    %v406 = vadd.f32 %v318, %v390
    %v407 = vadd.f32 %v319, %v391
    %409 = vset.pattern.permute.xlu0 0
    %410 = vperm.xlu0 %409, %v49
    %v411 = vpop.permute.xlu0 %410
    %414 = vset.pattern.permute.xlu0 0
    %415 = vperm.xlu0 %414, %v50
    %v416 = vpop.permute.xlu0 %415
    %419 = vset.pattern.permute.xlu0 0
    %420 = vperm.xlu0 %419, %v51
    %v421 = vpop.permute.xlu0 %420
    %424 = vset.pattern.permute.xlu0 0
    %425 = vperm.xlu0 %424, %v52
    %v426 = vpop.permute.xlu0 %425
    %v428 = vadd.f32 %v392, %v411
    %v429 = vadd.f32 %v393, %v411
    %v430 = vadd.f32 %v394, %v416
    %v431 = vadd.f32 %v395, %v416
    %v432 = vadd.f32 %v396, %v421
    %v433 = vadd.f32 %v397, %v421
    %v434 = vadd.f32 %v398, %v426
    %v435 = vadd.f32 %v399, %v426
    %v436 = vadd.f32 %v400, %v411
    %v437 = vadd.f32 %v401, %v411
    %v438 = vadd.f32 %v402, %v416
    %v439 = vadd.f32 %v403, %v416
    %v440 = vadd.f32 %v404, %v421
    %v441 = vadd.f32 %v405, %v421
    %v442 = vadd.f32 %v406, %v426
    %v443 = vadd.f32 %v407, %v426
    %v444 = vmax.f32 %v428, 0.0
    %v445 = vmax.f32 %v429, 0.0
    %v446 = vmax.f32 %v430, 0.0
    %v447 = vmax.f32 %v431, 0.0
    %v448 = vmax.f32 %v432, 0.0
    %v449 = vmax.f32 %v433, 0.0
    %v450 = vmax.f32 %v434, 0.0
    %v451 = vmax.f32 %v435, 0.0
    %v452 = vmax.f32 %v436, 0.0
    %v453 = vmax.f32 %v437, 0.0
    %v454 = vmax.f32 %v438, 0.0
    %v455 = vmax.f32 %v439, 0.0
    %v456 = vmax.f32 %v440, 0.0
    %v457 = vmax.f32 %v441, 0.0
    %v458 = vmax.f32 %v442, 0.0
    %v459 = vmax.f32 %v443, 0.0
    %v460 = vadd.f32 %v444, %v445
    %461 = vadd.xlane.f32.xlu0 %v460
    %v462 = vpop.xlane.xlu0 %461
    %v463 = vadd.f32 %v446, %v447
    %464 = vadd.xlane.f32.xlu0 %v463
    %v465 = vpop.xlane.xlu0 %464
    %v466 = vadd.f32 %v448, %v449
    %467 = vadd.xlane.f32.xlu0 %v466
    %v468 = vpop.xlane.xlu0 %467
    %v469 = vadd.f32 %v450, %v451
    %470 = vadd.xlane.f32.xlu0 %v469
    %v471 = vpop.xlane.xlu0 %470
    %v472 = vadd.f32 %v452, %v453
    %473 = vadd.xlane.f32.xlu0 %v472
    %v474 = vpop.xlane.xlu0 %473
    %v475 = vadd.f32 %v454, %v455
    %476 = vadd.xlane.f32.xlu0 %v475
    %v477 = vpop.xlane.xlu0 %476
    %v478 = vadd.f32 %v456, %v457
    %479 = vadd.xlane.f32.xlu0 %v478
    %v480 = vpop.xlane.xlu0 %479
    %v481 = vadd.f32 %v458, %v459
    %482 = vadd.xlane.f32.xlu0 %v481
    %v483 = vpop.xlane.xlu0 %482
    %v484 = vrcp.pop 256.0
    %v485 = vmul.f32 %v462, %v484
    %v486 = vmul.f32 %v465, %v484
    %v487 = vmul.f32 %v468, %v484
    %v488 = vmul.f32 %v471, %v484
    %v489 = vmul.f32 %v474, %v484
    %v490 = vmul.f32 %v477, %v484
    %v491 = vmul.f32 %v480, %v484
    %v492 = vmul.f32 %v483, %v484
    %v493 = vld [vmem:[%s1] sm:$0xff]
    %v494 = vld [vmem:[%s1 + $0x8] sm:$0xff]
    %v497 = vlaneseq
    %v498 = vshrl.u32 %v497, 7
    %v499 = vsub.s32 0, %v498
    %v500 = vrot.slane %v493, %v499
    %v501 = vlaneseq
    %v502 = vshrl.u32 %v501, 7
    %v503 = vsub.s32 4, %v502
    %v504 = vrot.slane %v493, %v503
    %v505 = vlaneseq
    %v506 = vshrl.u32 %v505, 7
    %v507 = vsub.s32 0, %v506
    %v508 = vrot.slane %v494, %v507
    %v509 = vlaneseq
    %v510 = vshrl.u32 %v509, 7
    %v511 = vsub.s32 4, %v510
    %v512 = vrot.slane %v494, %v511
    %v517 = vlaneseq
    %v518 = vshrl.u32 %v517, 7
    %v519 = vsub.s32 0, %v518
    %v520 = vrot.slane %v500, %v519
    %v521 = vlaneseq
    %v522 = vshrl.u32 %v521, 7
    %v523 = vsub.s32 0, %v522
    %v524 = vrot.slane %v504, %v523
    %v525 = vlaneseq
    %v526 = vshrl.u32 %v525, 7
    %v527 = vsub.s32 0, %v526
    %v528 = vrot.slane %v508, %v527
    %v529 = vlaneseq
    %v530 = vshrl.u32 %v529, 7
    %v531 = vsub.s32 0, %v530
    %v532 = vrot.slane %v512, %v531
    %v533 = vmul.f32 %v520, %v111
    %v534 = vmul.f32 %v524, %v111
    %v535 = vmul.f32 %v520, %v116
    %v536 = vmul.f32 %v524, %v116
    %v537 = vmul.f32 %v520, %v121
    %v538 = vmul.f32 %v524, %v121
    %v539 = vmul.f32 %v520, %v126
    %v540 = vmul.f32 %v524, %v126
    %v541 = vmul.f32 %v528, %v111
    %v542 = vmul.f32 %v532, %v111
    %v543 = vmul.f32 %v528, %v116
    %v544 = vmul.f32 %v532, %v116
    %v545 = vmul.f32 %v528, %v121
    %v546 = vmul.f32 %v532, %v121
    %v547 = vmul.f32 %v528, %v126
    %v548 = vmul.f32 %v532, %v126
    %v549 = vlaneseq
    %v550 = vshrl.u32 %v549, 7
    %v551 = vsub.s32 1, %v550
    %v552 = vrot.slane %v493, %v551
    %v553 = vlaneseq
    %v554 = vshrl.u32 %v553, 7
    %v555 = vsub.s32 5, %v554
    %v556 = vrot.slane %v493, %v555
    %v557 = vlaneseq
    %v558 = vshrl.u32 %v557, 7
    %v559 = vsub.s32 1, %v558
    %v560 = vrot.slane %v494, %v559
    %v561 = vlaneseq
    %v562 = vshrl.u32 %v561, 7
    %v563 = vsub.s32 5, %v562
    %v564 = vrot.slane %v494, %v563
    %v569 = vlaneseq
    %v570 = vshrl.u32 %v569, 7
    %v571 = vsub.s32 1, %v570
    %v572 = vrot.slane %v552, %v571
    %v573 = vlaneseq
    %v574 = vshrl.u32 %v573, 7
    %v575 = vsub.s32 1, %v574
    %v576 = vrot.slane %v556, %v575
    %v577 = vlaneseq
    %v578 = vshrl.u32 %v577, 7
    %v579 = vsub.s32 1, %v578
    %v580 = vrot.slane %v560, %v579
    %v581 = vlaneseq
    %v582 = vshrl.u32 %v581, 7
    %v583 = vsub.s32 1, %v582
    %v584 = vrot.slane %v564, %v583
    %v585 = vmul.f32 %v572, %v183
    %v586 = vmul.f32 %v576, %v183
    %v587 = vmul.f32 %v572, %v188
    %v588 = vmul.f32 %v576, %v188
    %v589 = vmul.f32 %v572, %v193
    %v590 = vmul.f32 %v576, %v193
    %v591 = vmul.f32 %v572, %v198
    %v592 = vmul.f32 %v576, %v198
    %v593 = vmul.f32 %v580, %v183
    %v594 = vmul.f32 %v584, %v183
    %v595 = vmul.f32 %v580, %v188
    %v596 = vmul.f32 %v584, %v188
    %v597 = vmul.f32 %v580, %v193
    %v598 = vmul.f32 %v584, %v193
    %v599 = vmul.f32 %v580, %v198
    %v600 = vmul.f32 %v584, %v198
    %v601 = vadd.f32 %v533, %v585
    %v602 = vadd.f32 %v534, %v586
    %v603 = vadd.f32 %v535, %v587
    %v604 = vadd.f32 %v536, %v588
    %v605 = vadd.f32 %v537, %v589
    %v606 = vadd.f32 %v538, %v590
    %v607 = vadd.f32 %v539, %v591
    %v608 = vadd.f32 %v540, %v592
    %v609 = vadd.f32 %v541, %v593
    %v610 = vadd.f32 %v542, %v594
    %v611 = vadd.f32 %v543, %v595
    %v612 = vadd.f32 %v544, %v596
    %v613 = vadd.f32 %v545, %v597
    %v614 = vadd.f32 %v546, %v598
    %v615 = vadd.f32 %v547, %v599
    %v616 = vadd.f32 %v548, %v600
    %v617 = vlaneseq
    %v618 = vshrl.u32 %v617, 7
    %v619 = vsub.s32 2, %v618
    %v620 = vrot.slane %v493, %v619
    %v621 = vlaneseq
    %v622 = vshrl.u32 %v621, 7
    %v623 = vsub.s32 6, %v622
    %v624 = vrot.slane %v493, %v623
    %v625 = vlaneseq
    %v626 = vshrl.u32 %v625, 7
    %v627 = vsub.s32 2, %v626
    %v628 = vrot.slane %v494, %v627
    %v629 = vlaneseq
    %v630 = vshrl.u32 %v629, 7
    %v631 = vsub.s32 6, %v630
    %v632 = vrot.slane %v494, %v631
    %v637 = vlaneseq
    %v638 = vshrl.u32 %v637, 7
    %v639 = vsub.s32 2, %v638
    %v640 = vrot.slane %v620, %v639
    %v641 = vlaneseq
    %v642 = vshrl.u32 %v641, 7
    %v643 = vsub.s32 2, %v642
    %v644 = vrot.slane %v624, %v643
    %v645 = vlaneseq
    %v646 = vshrl.u32 %v645, 7
    %v647 = vsub.s32 2, %v646
    %v648 = vrot.slane %v628, %v647
    %v649 = vlaneseq
    %v650 = vshrl.u32 %v649, 7
    %v651 = vsub.s32 2, %v650
    %v652 = vrot.slane %v632, %v651
    %v653 = vmul.f32 %v640, %v271
    %v654 = vmul.f32 %v644, %v271
    %v655 = vmul.f32 %v640, %v276
    %v656 = vmul.f32 %v644, %v276
    %v657 = vmul.f32 %v640, %v281
    %v658 = vmul.f32 %v644, %v281
    %v659 = vmul.f32 %v640, %v286
    %v660 = vmul.f32 %v644, %v286
    %v661 = vmul.f32 %v648, %v271
    %v662 = vmul.f32 %v652, %v271
    %v663 = vmul.f32 %v648, %v276
    %v664 = vmul.f32 %v652, %v276
    %v665 = vmul.f32 %v648, %v281
    %v666 = vmul.f32 %v652, %v281
    %v667 = vmul.f32 %v648, %v286
    %v668 = vmul.f32 %v652, %v286
    %v669 = vadd.f32 %v601, %v653
    %v670 = vadd.f32 %v602, %v654
    %v671 = vadd.f32 %v603, %v655
    %v672 = vadd.f32 %v604, %v656
    %v673 = vadd.f32 %v605, %v657
    %v674 = vadd.f32 %v606, %v658
    %v675 = vadd.f32 %v607, %v659
    %v676 = vadd.f32 %v608, %v660
    %v677 = vadd.f32 %v609, %v661
    %v678 = vadd.f32 %v610, %v662
    %v679 = vadd.f32 %v611, %v663
    %v680 = vadd.f32 %v612, %v664
    %v681 = vadd.f32 %v613, %v665
    %v682 = vadd.f32 %v614, %v666
    %v683 = vadd.f32 %v615, %v667
    %v684 = vadd.f32 %v616, %v668
    %v685 = vlaneseq
    %v686 = vshrl.u32 %v685, 7
    %v687 = vsub.s32 3, %v686
    %v688 = vrot.slane %v493, %v687
    %v689 = vlaneseq
    %v690 = vshrl.u32 %v689, 7
    %v691 = vsub.s32 7, %v690
    %v692 = vrot.slane %v493, %v691
    %v693 = vlaneseq
    %v694 = vshrl.u32 %v693, 7
    %v695 = vsub.s32 3, %v694
    %v696 = vrot.slane %v494, %v695
    %v697 = vlaneseq
    %v698 = vshrl.u32 %v697, 7
    %v699 = vsub.s32 7, %v698
    %v700 = vrot.slane %v494, %v699
    %v705 = vlaneseq
    %v706 = vshrl.u32 %v705, 7
    %v707 = vsub.s32 3, %v706
    %v708 = vrot.slane %v688, %v707
    %v709 = vlaneseq
    %v710 = vshrl.u32 %v709, 7
    %v711 = vsub.s32 3, %v710
    %v712 = vrot.slane %v692, %v711
    %v713 = vlaneseq
    %v714 = vshrl.u32 %v713, 7
    %v715 = vsub.s32 3, %v714
    %v716 = vrot.slane %v696, %v715
    %v717 = vlaneseq
    %v718 = vshrl.u32 %v717, 7
    %v719 = vsub.s32 3, %v718
    %v720 = vrot.slane %v700, %v719
    %v721 = vmul.f32 %v708, %v359
    %v722 = vmul.f32 %v712, %v359
    %v723 = vmul.f32 %v708, %v364
    %v724 = vmul.f32 %v712, %v364
    %v725 = vmul.f32 %v708, %v369
    %v726 = vmul.f32 %v712, %v369
    %v727 = vmul.f32 %v708, %v374
    %v728 = vmul.f32 %v712, %v374
    %v729 = vmul.f32 %v716, %v359
    %v730 = vmul.f32 %v720, %v359
    %v731 = vmul.f32 %v716, %v364
    %v732 = vmul.f32 %v720, %v364
    %v733 = vmul.f32 %v716, %v369
    %v734 = vmul.f32 %v720, %v369
    %v735 = vmul.f32 %v716, %v374
    %v736 = vmul.f32 %v720, %v374
    %v737 = vadd.f32 %v669, %v721
    %v738 = vadd.f32 %v670, %v722
    %v739 = vadd.f32 %v671, %v723
    %v740 = vadd.f32 %v672, %v724
    %v741 = vadd.f32 %v673, %v725
    %v742 = vadd.f32 %v674, %v726
    %v743 = vadd.f32 %v675, %v727
    %v744 = vadd.f32 %v676, %v728
    %v745 = vadd.f32 %v677, %v729
    %v746 = vadd.f32 %v678, %v730
    %v747 = vadd.f32 %v679, %v731
    %v748 = vadd.f32 %v680, %v732
    %v749 = vadd.f32 %v681, %v733
    %v750 = vadd.f32 %v682, %v734
    %v751 = vadd.f32 %v683, %v735
    %v752 = vadd.f32 %v684, %v736
    %v753 = vadd.f32 %v737, %v411
    %v754 = vadd.f32 %v738, %v411
    %v755 = vadd.f32 %v739, %v416
    %v756 = vadd.f32 %v740, %v416
    %v757 = vadd.f32 %v741, %v421
    %v758 = vadd.f32 %v742, %v421
    %v759 = vadd.f32 %v743, %v426
    %v760 = vadd.f32 %v744, %v426
    %v761 = vadd.f32 %v745, %v411
    %v762 = vadd.f32 %v746, %v411
    %v763 = vadd.f32 %v747, %v416
    %v764 = vadd.f32 %v748, %v416
    %v765 = vadd.f32 %v749, %v421
    %v766 = vadd.f32 %v750, %v421
    %v767 = vadd.f32 %v751, %v426
    %v768 = vadd.f32 %v752, %v426
    %v769 = vmax.f32 %v753, 0.0
    %v770 = vmax.f32 %v754, 0.0
    %v771 = vmax.f32 %v755, 0.0
    %v772 = vmax.f32 %v756, 0.0
    %v773 = vmax.f32 %v757, 0.0
    %v774 = vmax.f32 %v758, 0.0
    %v775 = vmax.f32 %v759, 0.0
    %v776 = vmax.f32 %v760, 0.0
    %v777 = vmax.f32 %v761, 0.0
    %v778 = vmax.f32 %v762, 0.0
    %v779 = vmax.f32 %v763, 0.0
    %v780 = vmax.f32 %v764, 0.0
    %v781 = vmax.f32 %v765, 0.0
    %v782 = vmax.f32 %v766, 0.0
    %v783 = vmax.f32 %v767, 0.0
    %v784 = vmax.f32 %v768, 0.0
    %v785 = vadd.f32 %v769, %v770
    %786 = vadd.xlane.f32.xlu0 %v785
    %v787 = vpop.xlane.xlu0 %786
    %v788 = vadd.f32 %v771, %v772
    %789 = vadd.xlane.f32.xlu0 %v788
    %v790 = vpop.xlane.xlu0 %789
    %v791 = vadd.f32 %v773, %v774
    %792 = vadd.xlane.f32.xlu0 %v791
    %v793 = vpop.xlane.xlu0 %792
    %v794 = vadd.f32 %v775, %v776
    %795 = vadd.xlane.f32.xlu0 %v794
    %v796 = vpop.xlane.xlu0 %795
    %v797 = vadd.f32 %v777, %v778
    %798 = vadd.xlane.f32.xlu0 %v797
    %v799 = vpop.xlane.xlu0 %798
    %v800 = vadd.f32 %v779, %v780
    %801 = vadd.xlane.f32.xlu0 %v800
    %v802 = vpop.xlane.xlu0 %801
    %v803 = vadd.f32 %v781, %v782
    %804 = vadd.xlane.f32.xlu0 %v803
    %v805 = vpop.xlane.xlu0 %804
    %v806 = vadd.f32 %v783, %v784
    %807 = vadd.xlane.f32.xlu0 %v806
    %v808 = vpop.xlane.xlu0 %807
    %v809 = vmul.f32 %v787, %v484
    %v810 = vmul.f32 %v790, %v484
    %v811 = vmul.f32 %v793, %v484
    %v812 = vmul.f32 %v796, %v484
    %v813 = vmul.f32 %v799, %v484
    %v814 = vmul.f32 %v802, %v484
    %v815 = vmul.f32 %v805, %v484
    %v816 = vmul.f32 %v808, %v484
    %v825 = vlaneseq
    %v826 = vand.u32 %v825, 127
    %v827 = vlaneseq
    %v828 = vshrl.u32 %v827, 7
    %v829 = vsub.s32 %v826, %v828
    %v830 = vrot.slane %v485, %v829
    %v831 = vadd.s32 %v826, 4294967288
    %v832 = vlaneseq
    %v833 = vshrl.u32 %v832, 7
    %v834 = vsub.s32 %v831, %v833
    %v835 = vrot.slane %v486, %v834
    %vm836 = vcmask 130112
    %v837 = vsel %vm836, %v835, %v830
    %v838 = vadd.s32 %v826, 4294967280
    %v839 = vlaneseq
    %v840 = vshrl.u32 %v839, 7
    %v841 = vsub.s32 %v838, %v840
    %v842 = vrot.slane %v487, %v841
    %vm843 = vcmask 195712
    %v844 = vsel %vm843, %v842, %v837
    %v845 = vadd.s32 %v826, 4294967272
    %v846 = vlaneseq
    %v847 = vshrl.u32 %v846, 7
    %v848 = vsub.s32 %v845, %v847
    %v849 = vrot.slane %v488, %v848
    %vm850 = vcmask 261312
    %v851 = vsel %vm850, %v849, %v844
    %v852 = vlaneseq
    %v853 = vshrl.u32 %v852, 7
    %v854 = vsub.s32 %v826, %v853
    %v855 = vrot.slane %v489, %v854
    %v856 = vlaneseq
    %v857 = vshrl.u32 %v856, 7
    %v858 = vsub.s32 %v831, %v857
    %v859 = vrot.slane %v490, %v858
    %v860 = vsel %vm836, %v859, %v855
    %v861 = vlaneseq
    %v862 = vshrl.u32 %v861, 7
    %v863 = vsub.s32 %v838, %v862
    %v864 = vrot.slane %v491, %v863
    %v865 = vsel %vm843, %v864, %v860
    %v866 = vlaneseq
    %v867 = vshrl.u32 %v866, 7
    %v868 = vsub.s32 %v845, %v867
    %v869 = vrot.slane %v492, %v868
    %v870 = vsel %vm850, %v869, %v865
    %vm871 = vcmask 1041409
    %v872 = vsel %vm871, %v870, %v851
    %v882 = vlaneseq
    %v883 = vshrl.u32 %v882, 7
    %v884 = vsub.s32 %v826, %v883
    %v885 = vrot.slane %v809, %v884
    %v886 = vlaneseq
    %v887 = vshrl.u32 %v886, 7
    %v888 = vsub.s32 %v831, %v887
    %v889 = vrot.slane %v810, %v888
    %v890 = vsel %vm836, %v889, %v885
    %v891 = vlaneseq
    %v892 = vshrl.u32 %v891, 7
    %v893 = vsub.s32 %v838, %v892
    %v894 = vrot.slane %v811, %v893
    %v895 = vsel %vm843, %v894, %v890
    %v896 = vlaneseq
    %v897 = vshrl.u32 %v896, 7
    %v898 = vsub.s32 %v845, %v897
    %v899 = vrot.slane %v812, %v898
    %v900 = vsel %vm850, %v899, %v895
    %v901 = vlaneseq
    %v902 = vshrl.u32 %v901, 7
    %v903 = vsub.s32 %v826, %v902
    %v904 = vrot.slane %v813, %v903
    %v905 = vlaneseq
    %v906 = vshrl.u32 %v905, 7
    %v907 = vsub.s32 %v831, %v906
    %v908 = vrot.slane %v814, %v907
    %v909 = vsel %vm836, %v908, %v904
    %v910 = vlaneseq
    %v911 = vshrl.u32 %v910, 7
    %v912 = vsub.s32 %v838, %v911
    %v913 = vrot.slane %v815, %v912
    %v914 = vsel %vm843, %v913, %v909
    %v915 = vlaneseq
    %v916 = vshrl.u32 %v915, 7
    %v917 = vsub.s32 %v845, %v916
    %v918 = vrot.slane %v816, %v917
    %v919 = vsel %vm850, %v918, %v914
    %vm920 = vcmask 1043459
    %v921 = vsel %vm920, %v919, %v900
    %vm923 = vcmask 1041408
    %v924 = vsel %vm923, %v872, %v921
    %v926 = vlaneseq
    %v927 = vshrl.u32 %v926, 7
    %v928 = vsub.s32 0, %v927
    %v929 = vrot.slane %v57, %v928
    %vm931 = vcmask 261120
    %v933 = vsel %vm931, %v924, 0
    %935 = vmatprep.subr.mxu0 0.0
    %936 = vmatpush1.msra.mxu0 %v53
    %937 = vmatprep.subr.mxu0 0.0
    %938 = vmatpush1.msra.mxu0 %v54
    %939 = vmatprep.subr.mxu0 0.0
    %940 = vmatpush1.msra.mxu0 %v55
    %941 = vmatprep.subr.mxu0 0.0
    %942 = vmatpush1.msra.mxu0 %v56
    %943 = vmatprep.subr.mxu0 0.0
    %944 = vmatpush1.msra.mxu0 0.0
    %945 = vmatprep.subr.mxu0 0.0
    %946 = vmatpush1.msra.mxu0 0.0
    %947 = vmatprep.subr.mxu0 0.0
    %948 = vmatpush1.msra.mxu0 0.0
    %949 = vmatprep.subr.mxu0 0.0
    %950 = vmatpush1.msra.mxu0 0.0
    %951 = vmatprep.subr.mxu0 0.0
    %952 = vmatpush1.msra.mxu0 0.0
    %953 = vmatprep.subr.mxu0 0.0
    %954 = vmatpush1.msra.mxu0 0.0
    %955 = vmatprep.subr.mxu0 0.0
    %956 = vmatpush1.msra.mxu0 0.0
    %957 = vmatprep.subr.mxu0 0.0
    %958 = vmatpush1.msra.mxu0 0.0
    %959 = vmatprep.subr.mxu0 0.0
    %960 = vmatpush1.msra.mxu0 0.0
    %961 = vmatprep.subr.mxu0 0.0
    %962 = vmatpush1.msra.mxu0 0.0
    %963 = vmatprep.subr.mxu0 0.0
    %964 = vmatpush1.msra.mxu0 0.0
    %965 = vmatprep.subr.mxu0 0.0
    %966 = vmatpush1.msra.mxu0 0.0
    %967 = vmatprep.subr.mxu0 0.0
    %968 = vmatpush1.msra.mxu0 0.0
    %969 = vmatprep.subr.mxu0 0.0
    %970 = vmatpush1.msra.mxu0 0.0
    %971 = vmatprep.subr.mxu0 0.0
    %972 = vmatpush1.msra.mxu0 0.0
    %973 = vmatprep.subr.mxu0 0.0
    %974 = vmatpush1.msra.mxu0 0.0
    %975 = vmatprep.subr.mxu0 0.0
    %976 = vmatpush1.msra.mxu0 0.0
    %977 = vmatprep.subr.mxu0 0.0
    %978 = vmatpush1.msra.mxu0 0.0
    %979 = vmatprep.subr.mxu0 0.0
    %980 = vmatpush1.msra.mxu0 0.0
    %981 = vmatprep.subr.mxu0 0.0
    %982 = vmatpush1.msra.mxu0 0.0
    %983 = vmatprep.subr.mxu0 0.0
    %984 = vmatpush1.msra.mxu0 0.0
    %985 = vmatprep.subr.mxu0 0.0
    %986 = vmatpush1.msra.mxu0 0.0
    %987 = vmatprep.subr.mxu0 0.0
    %988 = vmatpush1.msra.mxu0 0.0
    %989 = vmatprep.subr.mxu0 0.0
    %990 = vmatpush1.msra.mxu0 0.0
    %991 = vmatprep.subr.mxu0 0.0
    %992 = vmatpush1.msra.mxu0 0.0
    %993 = vmatprep.subr.mxu0 0.0
    %994 = vmatpush1.msra.mxu0 0.0
    %995 = vmatprep.subr.mxu0 0.0
    %996 = vmatpush1.msra.mxu0 0.0
    %997 = vmatprep.subr.mxu0 0.0
    %998 = vmatpush1.msra.mxu0 0.0
    %999 = vmatprep.mubr.f32.mxu0 0.0
    %1000 = vmatmul.mubr.f32.gmra.mrb[0].mxu0 %v933
    %v1001 = vpop.f32.mrb[0].mxu0
    %v1002 = vadd.f32 %v929, %v1001
    %v1003 = vpop.f32.mrb[0].mxu0
    %1004 = vdwg.mxu0
    %vm1005 = vcmask 517120
    %v1006 = vsel %vm1005, %v1002, 0.0
    %v1007 = vrot.slane %v1006, 4
    %v1008 = vadd.f32 %v1006, %v1007
    %v1009 = vrot.slane %v1008, 2
    %v1010 = vadd.f32 %v1008, %v1009
    %v1011 = vrot.slane %v1010, 1
    %v1012 = vadd.f32 %v1010, %v1011
    %v1013 = vrcp.pop 2.0
    %v1014 = vmul.f32 %v1012, %v1013
    %v1015 = vsub.f32 %v1002, %v1014
    %v1016 = vmul.f32 %v1015, %v1015
    %v1017 = vsel %vm1005, %v1016, 0.0
    %v1018 = vrot.slane %v1017, 4
    %v1019 = vadd.f32 %v1017, %v1018
    %v1020 = vrot.slane %v1019, 2
    %v1021 = vadd.f32 %v1019, %v1020
    %v1022 = vrot.slane %v1021, 1
    %v1023 = vadd.f32 %v1021, %v1022
    %v1024 = vmul.f32 %v1023, %v1013
    %v1025 = vadd.f32 %v1024, 1e-05
    %v1026 = vrsqrt.pop %v1025
    %v1027 = vmul.f32 %v1015, %v1026
    %v1029 = vrot.slane %v1002, 2
    %v1031 = vsel %vm1005, %v1029, 0.0
    %v1032 = vrot.slane %v1031, 4
    %v1033 = vadd.f32 %v1031, %v1032
    %v1034 = vrot.slane %v1033, 2
    %v1035 = vadd.f32 %v1033, %v1034
    %v1036 = vrot.slane %v1035, 1
    %v1037 = vadd.f32 %v1035, %v1036
    %v1038 = vmul.f32 %v1037, %v1013
    %v1039 = vsub.f32 %v1002, %v1038
    %v1040 = vmul.f32 %v1039, %v1039
    %v1042 = vrot.slane %v1040, 2
    %v1044 = vsel %vm1005, %v1042, 0.0
    %v1045 = vrot.slane %v1044, 4
    %v1046 = vadd.f32 %v1044, %v1045
    %v1047 = vrot.slane %v1046, 2
    %v1048 = vadd.f32 %v1046, %v1047
    %v1049 = vrot.slane %v1048, 1
    %v1050 = vadd.f32 %v1048, %v1049
    %v1051 = vmul.f32 %v1050, %v1013
    %v1052 = vadd.f32 %v1051, 1e-05
    %v1053 = vrsqrt.pop %v1052
    %v1054 = vmul.f32 %v1039, %v1053
    %v1055 = vsel %vm923, %v1027, %v1054
    %v1057 = vlaneseq
    %v1058 = vshrl.u32 %v1057, 7
    %v1059 = vsub.s32 0, %v1058
    %v1060 = vrot.slane %v58, %v1059
    %v1062 = vmul.f32 %v1055, %v1060
    %v1064 = vlaneseq
    %v1065 = vshrl.u32 %v1064, 7
    %v1066 = vsub.s32 0, %v1065
    %v1067 = vrot.slane %v59, %v1066
    %v1069 = vadd.f32 %v1062, %v1067
    %v1070 = vmax.f32 %v1069, 0.0
    %vm1071 = vcmask 523264
    %v1073 = vsel %vm1071, %v1070, 0
    %1075 = vmatprep.subr.mxu0 0.0
    %1076 = vmatpush1.msra.mxu0 %v60
    %1077 = vmatprep.subr.mxu0 0.0
    %1078 = vmatpush1.msra.mxu0 %v61
    %1079 = vmatprep.subr.mxu0 0.0
    %1080 = vmatpush1.msra.mxu0 %v62
    %1081 = vmatprep.subr.mxu0 0.0
    %1082 = vmatpush1.msra.mxu0 %v63
    %1083 = vmatprep.subr.mxu0 0.0
    %1084 = vmatpush1.msra.mxu0 %v64
    %1085 = vmatprep.subr.mxu0 0.0
    %1086 = vmatpush1.msra.mxu0 %v65
    %1087 = vmatprep.subr.mxu0 0.0
    %1088 = vmatpush1.msra.mxu0 %v66
    %1089 = vmatprep.subr.mxu0 0.0
    %1090 = vmatpush1.msra.mxu0 %v67
    %1091 = vmatprep.subr.mxu0 0.0
    %1092 = vmatpush1.msra.mxu0 0.0
    %1093 = vmatprep.subr.mxu0 0.0
    %1094 = vmatpush1.msra.mxu0 0.0
    %1095 = vmatprep.subr.mxu0 0.0
    %1096 = vmatpush1.msra.mxu0 0.0
    %1097 = vmatprep.subr.mxu0 0.0
    %1098 = vmatpush1.msra.mxu0 0.0
    %1099 = vmatprep.subr.mxu0 0.0
    %1100 = vmatpush1.msra.mxu0 0.0
    %1101 = vmatprep.subr.mxu0 0.0
    %1102 = vmatpush1.msra.mxu0 0.0
    %1103 = vmatprep.subr.mxu0 0.0
    %1104 = vmatpush1.msra.mxu0 0.0
    %1105 = vmatprep.subr.mxu0 0.0
    %1106 = vmatpush1.msra.mxu0 0.0
    %1107 = vmatprep.subr.mxu0 0.0
    %1108 = vmatpush1.msra.mxu0 0.0
    %1109 = vmatprep.subr.mxu0 0.0
    %1110 = vmatpush1.msra.mxu0 0.0
    %1111 = vmatprep.subr.mxu0 0.0
    %1112 = vmatpush1.msra.mxu0 0.0
    %1113 = vmatprep.subr.mxu0 0.0
    %1114 = vmatpush1.msra.mxu0 0.0
    %1115 = vmatprep.subr.mxu0 0.0
    %1116 = vmatpush1.msra.mxu0 0.0
    %1117 = vmatprep.subr.mxu0 0.0
    %1118 = vmatpush1.msra.mxu0 0.0
    %1119 = vmatprep.subr.mxu0 0.0
    %1120 = vmatpush1.msra.mxu0 0.0
    %1121 = vmatprep.subr.mxu0 0.0
    %1122 = vmatpush1.msra.mxu0 0.0
    %1123 = vmatprep.subr.mxu0 0.0
    %1124 = vmatpush1.msra.mxu0 0.0
    %1125 = vmatprep.subr.mxu0 0.0
    %1126 = vmatpush1.msra.mxu0 0.0
    %1127 = vmatprep.subr.mxu0 0.0
    %1128 = vmatpush1.msra.mxu0 0.0
    %1129 = vmatprep.subr.mxu0 0.0
    %1130 = vmatpush1.msra.mxu0 0.0
    %1131 = vmatprep.subr.mxu0 0.0
    %1132 = vmatpush1.msra.mxu0 0.0
    %1133 = vmatprep.subr.mxu0 0.0
    %1134 = vmatpush1.msra.mxu0 0.0
    %1135 = vmatprep.subr.mxu0 0.0
    %1136 = vmatpush1.msra.mxu0 0.0
    %1137 = vmatprep.subr.mxu0 0.0
    %1138 = vmatpush1.msra.mxu0 0.0
    %1139 = vmatprep.mubr.f32.mxu0 0.0
    %1140 = vmatmul.mubr.f32.gmra.mrb[0].mxu0 %v1073
    %v1141 = vpop.f32.mrb[0].mxu0
    %v1142 = vadd.f32 0.0, %v1141
    %v1143 = vpop.f32.mrb[0].mxu0
    %1144 = vdwg.mxu0
    %v1145 = vmul.f32 %v1142, %v1142
    %vm1146 = vcmask 257024
    %v1147 = vsel %vm1146, %v1145, 0.0
    %1148 = vadd.xlane.f32.xlu0 %v1147
    %v1149 = vpop.xlane.xlu0 %1148
    %v1150 = vmax.f32 %v1149, 1e-24
    %v1151 = vrsqrt.pop %v1150
    %v1152 = vmul.f32 %v1142, %v1151
    %v1153 = vmul.f32 %v924, %v924
    %v1154 = vsel %vm1146, %v1153, 0.0
    %1155 = vadd.xlane.f32.xlu0 %v1154
    %v1156 = vpop.xlane.xlu0 %1155
    %v1157 = vmax.f32 %v1156, 1e-24
    %v1158 = vrsqrt.pop %v1157
    %v1159 = vmul.f32 %v924, %v1158
    %v1160 = vmul.f32 %v1152, %v1159
    %v1161 = vsel %vm1146, %v1160, 0.0
    %1162 = vadd.xlane.f32.xlu0 %v1161
    %v1163 = vpop.xlane.xlu0 %1162
    %v1164 = vmul.f32 %v1163, 2.0
    %v1165 = vsub.f32 2.0, %v1164
    %vm1166 = vcmask 1043456
    %v1167 = vsel %vm1166, %v1165, 0.0
    %v1168 = vrot.slane %v1167, 4
    %v1169 = vadd.f32 %v1167, %v1168
    %v1170 = vrot.slane %v1169, 2
    %v1171 = vadd.f32 %v1169, %v1170
    %v1172 = vrot.slane %v1171, 1
    %v1173 = vadd.f32 %v1171, %v1172
    %s1174 = vtos %v1173
    %v1175 = vrcp.pop 2.0
    %s1176 = vtos %v1175
    %s1177 = smul.f32 %s1174, %s1176
    %s1178 = scalar_lea.smem [#allocation2], 0
    %1179 = sst [smem:[%s1178]] %s1177
    // Predicated region
    $region38: #{byol_forward.1} parent=1 // pred_check
      _
    $region39: #{byol_forward.1} parent=1 // pred_check_branch
      %1181 = sbr.rel (0) target = $region41
    $region40: #{byol_forward.1} parent=1 // pred_region
      %s1183 = ssub.s32 16, 16
      %1184 = vsyncadd [#allocation3], %s1183
      %1187 = dma.smem_to_hbm [#allocation2], 16, %s9, [#allocation3]
    $region41: #{byol_forward.1} parent=1 // pred_fallthru
      _
    // Predicated region
    $region42: #{byol_forward.1} parent=1 // pred_check
      _
    $region43: #{byol_forward.1} parent=1 // pred_check_branch
      %1189 = sbr.rel (0) target = $region45
    $region44: #{byol_forward.1} parent=1 // pred_region
      %1190 = dma.done [#allocation3], 16
    $region45: #{byol_forward.1} parent=1 // pred_fallthru
      _
    %1191 = sfence
    %1192 = vsyncpa [#allocation3], 1

</llo_original>
